<compile_context>
chip_gen: v6e
topology: v6e:2x2x1
jax: 0.10.0
libtpu: 0.0.40
codegen_flags: <defaults>
</compile_context>

<pallas_src>
import functools

import jax
import jax.numpy as jnp
from jax.experimental import pallas as pl
from jax.experimental.pallas import tpu as pltpu


# --------------------------------------------------------------------------
# Generation-aware knobs
# --------------------------------------------------------------------------
def _device_kind() -> str:
    try:
        return jax.devices()[0].device_kind.lower()
    except Exception:
        return ""


def _target_block_bytes() -> int:
    """Streaming block budget for the mem-bound elementwise pass."""
    kind = _device_kind()
    # v5e and older (or unknown): 16 MiB scoped-VMEM default -> 2 MiB blocks
    # (already at the roofline knee).  v6e / v7x: 32 MiB default -> 4 MiB.
    if (not kind) or any(g in kind for g in ("v2", "v3", "v4", "v5")):
        return 2 << 20
    return 4 << 20


def _bf16_compute_ok() -> bool:
    """bf16 VPU/EUP exist on v6e and later; keep f32 compute elsewhere."""
    kind = _device_kind()
    return any(g in kind for g in ("v6", "v7", "7x"))


# --------------------------------------------------------------------------
# Fused kernels:  out = tanh((input_1 @ W) * input2)
# --------------------------------------------------------------------------
def _fused_kernel_3d(x1_ref, w_ref, x2_ref, o_ref, *, compute_dtype):
    # x1_ref: (tb, D1)   w_ref: (D1, D2)   x2_ref / o_ref: (tb, ts, D2)
    x = jnp.dot(x1_ref[...], w_ref[...], preferred_element_type=jnp.float32)
    x = x.astype(compute_dtype)
    x2 = x2_ref[...].astype(compute_dtype)
    o_ref[...] = jnp.tanh(x[:, None, :] * x2).astype(o_ref.dtype)


def _fused_kernel_2d(x1_ref, w_ref, x2_ref, o_ref, *, compute_dtype):
    # x1_ref: (tb, D1)   w_ref: (D1, D2)   x2_ref / o_ref: (tb, D2)
    x = jnp.dot(x1_ref[...], w_ref[...], preferred_element_type=jnp.float32)
    x = x.astype(compute_dtype)
    x2 = x2_ref[...].astype(compute_dtype)
    o_ref[...] = jnp.tanh(x * x2).astype(o_ref.dtype)


# --------------------------------------------------------------------------
# Tile-size heuristics
# --------------------------------------------------------------------------
def _choose_tiles_3d(B, S, D2, itemsize, target_bytes):
    row_bytes = max(1, D2 * itemsize)

    # Minimum batch tile satisfying the sublane rule for the 2-D input_1
    # block (tb, D1): tb must be a multiple of 8 or the full batch.
    tb_min = B if B <= 8 else 8

    # Sequence tile: multiple of 8, or the full S.
    if S <= 8 or tb_min * S * row_bytes <= target_bytes:
        ts = S
    else:
        ts = max(8, (target_bytes // (tb_min * row_bytes)) // 8 * 8)

    # Batch tile: as large as the budget allows, multiple of 8 or full B.
    slab_bytes = max(1, ts * row_bytes)
    raw_tb = max(1, target_bytes // slab_bytes)
    if raw_tb >= B or B <= 8:
        tb = B
    else:
        tb = max(8, (raw_tb // 8) * 8)

    # Guarantee >=2 parallel grid steps (feeds both v7x TensorCores) when the
    # problem is large enough to be worth splitting.
    total_bytes = B * S * row_bytes
    if total_bytes >= (512 << 10) and pl.cdiv(B, tb) * pl.cdiv(S, ts) < 2:
        if B >= 16:
            tb = max(8, (B // 2) // 8 * 8)
        elif S >= 16:
            ts = max(8, (S // 2) // 8 * 8)
        # else: tiny B and S with a very wide D2 -> single step is fine.
    return tb, ts


def _choose_tb_2d(B, D2, itemsize, target_bytes):
    row_bytes = max(1, D2 * itemsize)
    raw_tb = max(1, target_bytes // row_bytes)
    if raw_tb >= B or B <= 8:
        tb = B
    else:
        tb = max(8, (raw_tb // 8) * 8)
    total_bytes = B * row_bytes
    if total_bytes >= (512 << 10) and pl.cdiv(B, tb) < 2 and B >= 16:
        tb = max(8, (B // 2) // 8 * 8)
    return tb


# --------------------------------------------------------------------------
# pallas_call wrappers
# --------------------------------------------------------------------------
def _bilinear_3d(input_1, weights, input2, out_dtype, compute_dtype, target_bytes):
    B, D1 = input_1.shape
    D2 = weights.shape[1]
    S = input2.shape[1]
    itemsize = jnp.dtype(input2.dtype).itemsize
    tb, ts = _choose_tiles_3d(B, S, D2, itemsize, target_bytes)
    grid = (pl.cdiv(B, tb), pl.cdiv(S, ts))

    kernel = functools.partial(_fused_kernel_3d, compute_dtype=compute_dtype)
    # NOTE: for D2 < 128, folding S into the lane dim wrapper-side would give
    # unmasked lane-dense stores; typical attention sizes (D2 >= 128) don't
    # need it, so we keep the straightforward (tb, ts, D2) layout.
    return pl.pallas_call(
        kernel,
        out_shape=jax.ShapeDtypeStruct((B, S, D2), out_dtype),
        grid_spec=pl.GridSpec(
            grid=grid,
            in_specs=[
                pl.BlockSpec((tb, D1), lambda b, s: (b, 0)),        # input_1 rows
                pl.BlockSpec((D1, D2), lambda b, s: (0, 0)),        # W, VMEM-resident
                pl.BlockSpec((tb, ts, D2), lambda b, s: (b, s, 0)),  # input2
            ],
            out_specs=pl.BlockSpec((tb, ts, D2), lambda b, s: (b, s, 0)),
        ),
        compiler_params=pltpu.CompilerParams(
            dimension_semantics=("parallel", "parallel")),
    )(input_1, weights, input2)


def _bilinear_2d(input_1, weights, input2, out_dtype, compute_dtype, target_bytes):
    B, D1 = input_1.shape
    D2 = weights.shape[1]
    itemsize = jnp.dtype(input2.dtype).itemsize
    tb = _choose_tb_2d(B, D2, itemsize, target_bytes)
    grid = (pl.cdiv(B, tb),)

    kernel = functools.partial(_fused_kernel_2d, compute_dtype=compute_dtype)
    return pl.pallas_call(
        kernel,
        out_shape=jax.ShapeDtypeStruct((B, D2), out_dtype),
        grid_spec=pl.GridSpec(
            grid=grid,
            in_specs=[
                pl.BlockSpec((tb, D1), lambda b: (b, 0)),   # input_1 rows
                pl.BlockSpec((D1, D2), lambda b: (0, 0)),   # W, VMEM-resident
                pl.BlockSpec((tb, D2), lambda b: (b, 0)),   # input2
            ],
            out_specs=pl.BlockSpec((tb, D2), lambda b: (b, 0)),
        ),
        compiler_params=pltpu.CompilerParams(
            dimension_semantics=("parallel",)),
    )(input_1, weights, input2)


# --------------------------------------------------------------------------
# Public wrapper matching Bilinear.forward
# --------------------------------------------------------------------------
def bilinear_forward(input_1, weights, input2):
    """input_1: (B, D1); weights: (D1, D2); input2: (B, S, D2) or (B, D2)."""
    B, D1 = input_1.shape
    assert weights.shape[0] == D1
    D2 = weights.shape[1]

    out_dtype = jnp.result_type(input_1.dtype, weights.dtype, input2.dtype)
    compute_dtype = (jnp.bfloat16
                     if out_dtype == jnp.bfloat16 and _bf16_compute_ok()
                     else jnp.float32)
    target_bytes = _target_block_bytes()

    if input2.ndim == 2:
        # Equal-rank branch of the PyTorch module: no unsqueeze.
        assert input2.shape == (B, D2)
        return _bilinear_2d(input_1, weights, input2,
                            out_dtype, compute_dtype, target_bytes)
    if input2.ndim == 3:
        assert input2.shape[0] == B and input2.shape[2] == D2
        return _bilinear_3d(input_1, weights, input2,
                            out_dtype, compute_dtype, target_bytes)
    # TODO(synk): general N-d broadcasting of torch.matmul/torch.mul beyond the
    # (B, D1) x (B, S, D2) and (B, D1) x (B, D2) cases is not implemented.
    raise NotImplementedError(f"unsupported input2 rank: {input2.ndim}")


def bilinear_reference(input_1, weights, input2):
    x = input_1 @ weights
    if x.ndim != input2.ndim:
        x = x[:, None, :]
    return jnp.tanh(x * input2)


if __name__ == "__main__":
    key = jax.random.PRNGKey(0)
    k_w, k_x1, k_x2, k_x2b = jax.random.split(key, 4)

    B, S = 2, 8
    input1_dim, input2_dim = 32, 128

    # Deterministic parameter init mirroring uniform_(-0.25, 0.25)
    weights = jax.random.uniform(
        k_w, (input1_dim, input2_dim), jnp.float32, minval=-0.25, maxval=0.25)

    input_1 = jax.random.normal(k_x1, (B, input1_dim), jnp.float32)
    input2_3d = jax.random.normal(k_x2, (B, S, input2_dim), jnp.float32)
    input2_2d = jax.random.normal(k_x2b, (B, input2_dim), jnp.float32)

    # Rank-mismatch (unsqueeze) branch
    out3 = jax.block_until_ready(bilinear_forward(input_1, weights, input2_3d))
    ref3 = bilinear_reference(input_1, weights, input2_3d)
    assert out3.shape == ref3.shape == (B, S, input2_dim)
    assert jnp.allclose(out3, ref3, atol=1e-5, rtol=1e-5)

    # Equal-rank branch
    out2 = jax.block_until_ready(bilinear_forward(input_1, weights, input2_2d))
    ref2 = bilinear_reference(input_1, weights, input2_2d)
    assert out2.shape == ref2.shape == (B, input2_dim)
    assert jnp.allclose(out2, ref2, atol=1e-5, rtol=1e-5)

    print("KERNEL_OK")
</pallas_src>

<mosaic_0001>
module attributes {stable_mosaic.version = 11 : i64} {
  func.func @_fused_kernel_3d(%arg0: i32, %arg1: i32, %arg2: memref<2x32xf32, #tpu.memory_space<vmem>>, %arg3: memref<32x128xf32, #tpu.memory_space<vmem>>, %arg4: memref<2x8x128xf32, #tpu.memory_space<vmem>>, %arg5: memref<2x8x128xf32, #tpu.memory_space<vmem>>) attributes {dimension_semantics = [#tpu.dimension_semantics<parallel>, #tpu.dimension_semantics<parallel>], iteration_bounds = array<i64: 1, 1>, scalar_prefetch = 0 : i64, scratch_operands = 0 : i64, tpu.core_type = #tpu.core_type<tc>, window_params = [{transform_indices = @transform_0, window_bounds = array<i64: 2, 32>}, {pipeline_mode = #tpu.pipeline_mode<synchronous>, transform_indices = @transform_1, window_bounds = array<i64: 32, 128>}, {transform_indices = @transform_2, window_bounds = array<i64: 2, 8, 128>}, {transform_indices = @transform_3, window_bounds = array<i64: 2, 8, 128>}]} {
    %c0 = arith.constant 0 : index
    %c0_0 = arith.constant 0 : index
    %0 = vector.load %arg2[%c0, %c0_0] : memref<2x32xf32, #tpu.memory_space<vmem>>, vector<2x32xf32>
    %c0_1 = arith.constant 0 : index
    %c0_2 = arith.constant 0 : index
    %1 = vector.load %arg3[%c0_1, %c0_2] : memref<32x128xf32, #tpu.memory_space<vmem>>, vector<32x128xf32>
    %cst = arith.constant dense<0.000000e+00> : vector<2x128xf32>
    %2 = tpu.matmul %0, %1, %cst {dimension_numbers = #tpu.dot_dimension_numbers<[1], [0], [0], [1], [0, 0, 1, 1], [], []>} : vector<2x32xf32>, vector<32x128xf32>, vector<2x128xf32> -> vector<2x128xf32>
    %c0_3 = arith.constant 0 : index
    %c0_4 = arith.constant 0 : index
    %c0_5 = arith.constant 0 : index
    %3 = vector.load %arg4[%c0_3, %c0_4, %c0_5] : memref<2x8x128xf32, #tpu.memory_space<vmem>>, vector<2x8x128xf32>
    %4 = vector.shape_cast %2 : vector<2x128xf32> to vector<2x1x128xf32>
    %5 = vector.broadcast %4 : vector<2x1x128xf32> to vector<2x8x128xf32>
    %6 = arith.mulf %5, %3 : vector<2x8x128xf32>
    %7 = math.tanh %6 : vector<2x8x128xf32>
    %c0_6 = arith.constant 0 : index
    %c0_7 = arith.constant 0 : index
    %c0_8 = arith.constant 0 : index
    %8 = vector.load %arg5[%c0_6, %c0_7, %c0_8] : memref<2x8x128xf32, #tpu.memory_space<vmem>>, vector<2x8x128xf32>
    tpu.vector_store %arg5[%c0_6, %c0_7, %c0_8], %7 {strides = array<i32>} : memref<2x8x128xf32, #tpu.memory_space<vmem>>, vector<2x8x128xf32>,
    return
  }
  func.func @transform_0(%arg0: i32, %arg1: i32) -> (i32, i32) {
    %c0_i32 = arith.constant 0 : i32
    %c0_i32_0 = arith.constant 0 : i32
    return %arg0, %c0_i32 : i32, i32
  }
  func.func @transform_1(%arg0: i32, %arg1: i32) -> (i32, i32) {
    %c0_i32 = arith.constant 0 : i32
    %c0_i32_0 = arith.constant 0 : i32
    %c0_i32_1 = arith.constant 0 : i32
    return %c0_i32, %c0_i32_0 : i32, i32
  }
  func.func @transform_2(%arg0: i32, %arg1: i32) -> (i32, i32, i32) {
    %c0_i32 = arith.constant 0 : i32
    %c0_i32_0 = arith.constant 0 : i32
    return %arg0, %arg1, %c0_i32 : i32, i32, i32
  }
  func.func @transform_3(%arg0: i32, %arg1: i32) -> (i32, i32, i32) {
    %c0_i32 = arith.constant 0 : i32
    %c0_i32_0 = arith.constant 0 : i32
    return %arg0, %arg1, %c0_i32 : i32, i32, i32
  }
}

</mosaic_0001>

<llo_original>
// kernel: tpu_custom_call.1
$region0: #{tpu_custom_call.1}
  #allocation0 [shape = 'u32[]', space=smem, size = 0x4, offset = 0x4, fixed_abs, tag = 'smem constant byte address 0x4 - core index']
  #allocation1 [shape = 'u32[144,128]{1,0:T(1,128)}', space=vmem, size = 0x12000, scoped, tag = 'internal scratch']
  %s0 = inlined_call_operand.hbm [shape: f32[2,32], index: 0, kind: input, shape index: {}]
  %s1 = inlined_call_operand.hbm [shape: f32[32,128], index: 1, kind: input, shape index: {}]
  %s2 = inlined_call_operand.hbm [shape: f32[2,8,128], index: 2, kind: input, shape index: {}]
  %s3 = inlined_call_operand.hbm [shape: f32[2,8,128], index: 3, kind: output, shape index: {}]
  %s4 = sld [smem:[#allocation0]]
  $region34: #{tpu_custom_call.1} parent=0
    _
  %s6 = ssub.s32 1, %s4
  %s7 = scalar_select 0, %s6, %s4
  $region1: #{tpu_custom_call.1} parent=0
    #allocation2 [shape = 'u8[1024]{0}', space=vmem, size = 0x400, scoped, tag = 'input window, operand 0, single buffered']
    #allocation3 [shape = 's32[1]{0}', space=sflag, size = 0x4, scoped, tag = 'scoped memory for tpu_custom_call.1']
    #allocation4 [shape = 's32[1]{0}', space=sflag, size = 0x4, scoped, tag = 'scoped memory for tpu_custom_call.1']
    #allocation5 [shape = 'u8[16384]{0}', space=vmem, size = 0x4000, scoped, tag = 'input window, operand 1, single buffered']
    #allocation6 [shape = 's32[1]{0}', space=sflag, size = 0x4, scoped, tag = 'scoped memory for tpu_custom_call.1']
    #allocation7 [shape = 'u8[8192]{0}', space=vmem, size = 0x2000, scoped, tag = 'input window, operand 2, single buffered']
    #allocation8 [shape = 'u8[8192]{0}', space=vmem, size = 0x2000, scoped, tag = 'output window, operand 0, single buffered']
    %8 = vsyncpa [#allocation3], 0
    %9 = vsyncpa [#allocation6], 0
    %10 = vsyncpa [#allocation4], 0
    // Predicated region
    $region2: #{tpu_custom_call.1} parent=1 // pred_check
      _
    $region3: #{tpu_custom_call.1} parent=1 // pred_check_branch
      %12 = sbr.rel (0) target = $region5
    $region4: #{tpu_custom_call.1} parent=1 // pred_region
      %s14 = ssub.s32 32, 32
      %15 = vsyncadd [#allocation3], %s14
      %s17 = sshll.u32 [#allocation2], 4
      %s18 = int_to_ptr.vmem [resolvable:$true] %s17
      %20 = dma.hbm_to_vmem [thread:$0]  %s0, 32, %s18, [#allocation3]
    $region5: #{tpu_custom_call.1} parent=1 // pred_fallthru
      _
    // Predicated region
    $region6: #{tpu_custom_call.1} parent=1 // pred_check
      _
    $region7: #{tpu_custom_call.1} parent=1 // pred_check_branch
      %22 = sbr.rel (0) target = $region9
    $region8: #{tpu_custom_call.1} parent=1 // pred_region
      %s24 = ssub.s32 512, 512
      %25 = vsyncadd [#allocation6], %s24
      %s26 = sshll.u32 [#allocation5], 4
      %s27 = int_to_ptr.vmem [resolvable:$true] %s26
      %32 = dma.hbm_to_vmem [thread:$0]  %s1, 512, %s27, [#allocation6], 128, 128, 8
    $region9: #{tpu_custom_call.1} parent=1 // pred_fallthru
      _
    // Predicated region
    $region10: #{tpu_custom_call.1} parent=1 // pred_check
      _
    $region11: #{tpu_custom_call.1} parent=1 // pred_check_branch
      %34 = sbr.rel (0) target = $region13
    $region12: #{tpu_custom_call.1} parent=1 // pred_region
      %s36 = ssub.s32 256, 256
      %37 = vsyncadd [#allocation6], %s36
      %s38 = sshll.u32 [#allocation7], 4
      %s39 = int_to_ptr.vmem [resolvable:$true] %s38
      %44 = dma.hbm_to_vmem [thread:$0]  %s2, 256, %s39, [#allocation6], 128, 128, 8
    $region13: #{tpu_custom_call.1} parent=1 // pred_fallthru
      _
    // Predicated region
    $region14: #{tpu_custom_call.1} parent=1 // pred_check
      _
    $region15: #{tpu_custom_call.1} parent=1 // pred_check_branch
      %46 = sbr.rel (0) target = $region17
    $region16: #{tpu_custom_call.1} parent=1 // pred_region
      %47 = dma.done [#allocation3], 32
    $region17: #{tpu_custom_call.1} parent=1 // pred_fallthru
      _
    // Predicated region
    $region18: #{tpu_custom_call.1} parent=1 // pred_check
      _
    $region19: #{tpu_custom_call.1} parent=1 // pred_check_branch
      %49 = sbr.rel (0) target = $region21
    $region20: #{tpu_custom_call.1} parent=1 // pred_region
      %50 = dma.done [#allocation6], 512
    $region21: #{tpu_custom_call.1} parent=1 // pred_fallthru
      _
    // Predicated region
    $region22: #{tpu_custom_call.1} parent=1 // pred_check
      _
    $region23: #{tpu_custom_call.1} parent=1 // pred_check_branch
      %52 = sbr.rel (0) target = $region25
    $region24: #{tpu_custom_call.1} parent=1 // pred_region
      %53 = dma.done [#allocation6], 256
    $region25: #{tpu_custom_call.1} parent=1 // pred_fallthru
      _
    %v54 = vld [vmem:[#allocation2] sm:$0x3]
    %v55 = vld [vmem:[#allocation5] sm:$0xff]
    %v56 = vld [vmem:[#allocation5 + $0x8] sm:$0xff]
    %v57 = vld [vmem:[#allocation5 + $0x10] sm:$0xff]
    %v58 = vld [vmem:[#allocation5 + $0x18] sm:$0xff]
    %vm59 = vcmask 261120
    %v61 = vsel %vm59, %v54, 0
    %63 = vmatprep.subr.mxu0 0.0
    %64 = vmatpush1.msra.mxu0 0.0
    %65 = vmatprep.subr.mxu0 0.0
    %66 = vmatpush1.msra.mxu0 0.0
    %67 = vmatprep.subr.mxu0 0.0
    %68 = vmatpush1.msra.mxu0 0.0
    %69 = vmatprep.subr.mxu0 0.0
    %70 = vmatpush1.msra.mxu0 0.0
    %71 = vmatprep.subr.mxu0 0.0
    %72 = vmatpush1.msra.mxu0 0.0
    %73 = vmatprep.subr.mxu0 0.0
    %74 = vmatpush1.msra.mxu0 0.0
    %75 = vmatprep.subr.mxu0 0.0
    %76 = vmatpush1.msra.mxu0 0.0
    %77 = vmatprep.subr.mxu0 0.0
    %78 = vmatpush1.msra.mxu0 0.0
    %79 = vmatprep.subr.mxu0 0.0
    %80 = vmatpush1.msra.mxu0 0.0
    %81 = vmatprep.subr.mxu0 0.0
    %82 = vmatpush1.msra.mxu0 0.0
    %83 = vmatprep.subr.mxu0 0.0
    %84 = vmatpush1.msra.mxu0 0.0
    %85 = vmatprep.subr.mxu0 0.0
    %86 = vmatpush1.msra.mxu0 0.0
    %87 = vmatprep.subr.mxu0 0.0
    %88 = vmatpush1.msra.mxu0 %v58
    %89 = vmatprep.subr.mxu0 0.0
    %90 = vmatpush1.msra.mxu0 %v57
    %91 = vmatprep.subr.mxu0 0.0
    %92 = vmatpush1.msra.mxu0 %v56
    %93 = vmatprep.subr.mxu0 0.0
    %94 = vmatpush1.msra.mxu0 %v55
    %95 = vmatprep.subr.mxu0 0.0
    %96 = vmatpush2.msra.mxu0 0.0
    %97 = vmatprep.subr.mxu0 0.0
    %98 = vmatpush2.msra.mxu0 0.0
    %99 = vmatprep.subr.mxu0 0.0
    %100 = vmatpush2.msra.mxu0 0.0
    %101 = vmatprep.subr.mxu0 0.0
    %102 = vmatpush2.msra.mxu0 0.0
    %103 = vmatprep.subr.mxu0 0.0
    %104 = vmatpush2.msra.mxu0 0.0
    %105 = vmatprep.subr.mxu0 0.0
    %106 = vmatpush2.msra.mxu0 0.0
    %107 = vmatprep.subr.mxu0 0.0
    %108 = vmatpush2.msra.mxu0 0.0
    %109 = vmatprep.subr.mxu0 0.0
    %110 = vmatpush2.msra.mxu0 0.0
    %111 = vmatprep.subr.mxu0 0.0
    %112 = vmatpush2.msra.mxu0 0.0
    %113 = vmatprep.subr.mxu0 0.0
    %114 = vmatpush2.msra.mxu0 0.0
    %115 = vmatprep.subr.mxu0 0.0
    %116 = vmatpush2.msra.mxu0 0.0
    %117 = vmatprep.subr.mxu0 0.0
    %118 = vmatpush2.msra.mxu0 0.0
    %119 = vmatprep.subr.mxu0 0.0
    %120 = vmatpush2.msra.mxu0 0.0
    %121 = vmatprep.subr.mxu0 0.0
    %122 = vmatpush2.msra.mxu0 0.0
    %123 = vmatprep.subr.mxu0 0.0
    %124 = vmatpush2.msra.mxu0 0.0
    %125 = vmatprep.subr.mxu0 0.0
    %126 = vmatpush2.msra.mxu0 0.0
    %127 = vmatprep.mubr.f32.mxu0 0.0
    %128 = vmatmul.mubr.f32.gmra.mxu0 %v61
    %v129 = vpop.f32.mrf.mxu0
    %v130 = vadd.f32 0.0, %v129
    %v131 = vpop.f32.mrf.mxu0
    %132 = vdwg.mxu0
    %v133 = vld [vmem:[#allocation7] sm:$0xff]
    %v134 = vld [vmem:[#allocation7 + $0x8] sm:$0xff]
    %v137 = vunpack.c.l.s4 1966171168
    %v138 = vunpack.c.0.s8 %v137
    %v139 = vlaneseq
    %v140 = vshrl.u32 %v139, 7
    %v141 = vsub.s32 %v138, %v140
    %v142 = vrot.slane %v130, %v141
    %v143 = vcombine.high %v142, %v142
    %v145 = vunpack.c.l.s4 1966171168
    %v146 = vunpack.c.0.s8 %v145
    %v147 = vlaneseq
    %v148 = vshrl.u32 %v147, 7
    %v149 = vsub.s32 %v146, %v148
    %v150 = vrot.slane %v142, %v149
    %v152 = vunpack.c.l.s4 1966171168
    %v153 = vunpack.c.0.s8 %v152
    %v154 = vlaneseq
    %v155 = vshrl.u32 %v154, 7
    %v156 = vsub.s32 %v153, %v155
    %v157 = vrot.slane %v143, %v156
    %v158 = vlaneseq
    %v159 = vshrl.u32 %v158, 7
    %v160 = vsub.s32 0, %v159
    %v161 = vrot.slane %v150, %v160
    %v162 = vlaneseq
    %v163 = vshrl.u32 %v162, 7
    %v164 = vsub.s32 0, %v163
    %v165 = vrot.slane %v157, %v164
    %v168 = vmul.f32 %v161, %v133
    %v169 = vmul.f32 %v165, %v134
    %v170 = vtanh.pop %v168
    %v171 = vtanh.pop %v169
    %172 = vst [vmem:[#allocation8] sm:$0xff] %v170
    %173 = vst [vmem:[#allocation8 + $0x8] sm:$0xff] %v171
    // Predicated region
    $region26: #{tpu_custom_call.1} parent=1 // pred_check
      _
    $region27: #{tpu_custom_call.1} parent=1 // pred_check_branch
      %175 = sbr.rel (0) target = $region29
    $region28: #{tpu_custom_call.1} parent=1 // pred_region
      %s177 = ssub.s32 256, 256
      %178 = vsyncadd [#allocation4], %s177
      %s179 = sshll.u32 [#allocation8], 4
      %s180 = int_to_ptr.vmem [resolvable:$true] %s179
      %185 = dma.vmem_to_hbm [thread:$0]  %s180, 256, %s3, [#allocation4], 128, 128, 8
    $region29: #{tpu_custom_call.1} parent=1 // pred_fallthru
      _
    // Predicated region
    $region30: #{tpu_custom_call.1} parent=1 // pred_check
      _
    $region31: #{tpu_custom_call.1} parent=1 // pred_check_branch
      %187 = sbr.rel (0) target = $region33
    $region32: #{tpu_custom_call.1} parent=1 // pred_region
      %188 = dma.done [#allocation4], 256
    $region33: #{tpu_custom_call.1} parent=1 // pred_fallthru
      _
    %189 = vsyncpa [#allocation3], 1
    %190 = vsyncpa [#allocation6], 1
    %191 = vsyncpa [#allocation4], 1

</llo_original>
